<compile_context>
chip_gen: v5e
topology: v5e:2x2
jax: 0.10.0
libtpu: 0.0.40
codegen_flags: <defaults>
</compile_context>

<pallas_src>
import jax
import jax.numpy as jnp
from jax.experimental import pallas as pl
from jax.experimental.pallas import tpu as pltpu


def _round_up(a: int, m: int) -> int:
    return (a + m - 1) // m * m


def _mlp_kernel(x_ref, w_ref, b_ref, o_ref):
    """One (i, j, k) grid step of y = relu(x @ w + b).

    The output block index (i, j) does not depend on k, so o_ref stays
    resident in VMEM across the whole K loop and doubles as the f32
    accumulator (no scratch needed for an f32 output).
    """
    k = pl.program_id(2)

    @pl.when(k == 0)
    def _():
        o_ref[...] = jnp.zeros_like(o_ref)

    o_ref[...] += jnp.dot(x_ref[...], w_ref[...],
                          preferred_element_type=jnp.float32)

    @pl.when(k == pl.num_programs(2) - 1)
    def _():
        # Bias + ReLU once, in the epilogue.
        o_ref[...] = jnp.maximum(o_ref[...] + b_ref[...], 0.0)


def _physical_vmem_bytes() -> int:
    phys = 64 << 20  # conservative fallback = v7x physical VMEM
    try:
        phys = int(pltpu.get_tpu_info().vmem_capacity_bytes)
    except Exception:
        pass
    return phys


def make_mlp(w, b, *, operand_dtype=jnp.bfloat16,
             tile_m=2048, tile_n=1024, tile_k=1024):
    """One-time prep for y = relu(x @ w + b).

    w: (D_in, D_out) f32 (transposed nn.Linear weight), b: (D_out,) f32.
    Pads + casts weight/bias to `operand_dtype` once (HBM-level cast); the
    returned forward(x) only pads/casts the activation per call.
    NOTE: bf16 operands (default) change precision vs the f32 PyTorch module;
    accumulation remains f32. Pass operand_dtype=jnp.float32 for exact f32.
    """
    D_in, D_out = w.shape
    assert b.shape == (D_out,)

    opsize = jnp.dtype(operand_dtype).itemsize
    sub = 8 if opsize >= 4 else (16 if opsize == 2 else 32)  # sublane multiple

    tn = min(tile_n, _round_up(D_out, 128))
    tk = min(tile_k, _round_up(D_in, 128))
    Kp, Np = _round_up(D_in, tk), _round_up(D_out, tn)

    wp = w
    if (Kp, Np) != (D_in, D_out):
        wp = jnp.pad(w, ((0, Kp - D_in), (0, Np - D_out)))
    wp = wp.astype(operand_dtype)                    # one-time HBM cast
    bp = b if Np == D_out else jnp.pad(b, (0, Np - D_out))
    bp = bp.reshape(1, Np).astype(jnp.float32)       # bias applied in f32

    phys_vmem = _physical_vmem_bytes()
    budget = int(phys_vmem * 0.7)                    # pipeline/compiler headroom

    def forward(x):
        assert x.ndim == 2 and x.shape[1] == D_in
        B = x.shape[0]

        # tm covers the whole padded batch when it fits the VMEM budget.
        tm = min(tile_m, _round_up(B, sub))
        tk_e, tn_e = tk, tn

        def need(tm_, tk_, tn_):
            return (2 * tm_ * tk_ * opsize        # x blocks (double-buffered)
                    + 2 * tk_ * tn_ * opsize      # w blocks
                    + 2 * tm_ * tn_ * 4           # out / accumulator blocks
                    + 2 * tn_ * 4)                # bias blocks

        # Rarely triggered: shrink the largest halvable tile until it fits.
        while need(tm, tk_e, tn_e) > budget:
            cand = []
            if tm % (2 * sub) == 0:
                cand.append(("m", tm))
            if tk_e % 256 == 0:
                cand.append(("k", tk_e))
            if tn_e % 256 == 0:
                cand.append(("n", tn_e))
            if not cand:
                break
            which = max(cand, key=lambda t: t[1])[0]
            if which == "m":
                tm //= 2
            elif which == "k":
                tk_e //= 2
            else:
                tn_e //= 2

        # v7x megacore: guarantee >=2 blocks along a "parallel" axis when
        # both M and N grids would otherwise be 1.
        if pl.cdiv(B, tm) == 1 and Np // tn_e == 1 and tn_e % 256 == 0:
            tn_e //= 2

        Bp = _round_up(B, tm)
        xp = x.astype(operand_dtype)                 # HBM-level operand cast
        if (Bp, Kp) != (B, D_in):
            xp = jnp.pad(xp, ((0, Bp - B), (0, Kp - D_in)))

        grid = (Bp // tm, Np // tn_e, Kp // tk_e)

        cost = pl.CostEstimate(
            flops=2 * Bp * Kp * Np,
            transcendentals=0,
            bytes_accessed=(Bp * Kp * opsize + Kp * Np * opsize
                            + Np * 4 + Bp * Np * 4),
        )
        vmem_limit = min(max(int(1.5 * need(tm, tk_e, tn_e)), 32 << 20),
                         int(phys_vmem * 0.85))

        out = pl.pallas_call(
            _mlp_kernel,
            out_shape=jax.ShapeDtypeStruct((Bp, Np), jnp.float32),
            grid_spec=pltpu.PrefetchScalarGridSpec(
                num_scalar_prefetch=0,
                grid=grid,
                in_specs=[
                    pl.BlockSpec((tm, tk_e), lambda i, j, k: (i, k)),    # x
                    pl.BlockSpec((tk_e, tn_e), lambda i, j, k: (k, j)),  # w
                    pl.BlockSpec((1, tn_e), lambda i, j, k: (0, j)),     # bias
                ],
                out_specs=pl.BlockSpec((tm, tn_e), lambda i, j, k: (i, j)),
            ),
            compiler_params=pltpu.CompilerParams(
                dimension_semantics=("parallel", "parallel", "arbitrary"),
                vmem_limit_bytes=vmem_limit,
            ),
            cost_estimate=cost,
        )(xp, wp, bp)

        return out[:B, :D_out]

    return forward


def mlp_forward(x, w, b, **kwargs):
    """Convenience one-shot wrapper (prep + forward)."""
    return make_mlp(w, b, **kwargs)(x)


def init_mlp_params(key, input_dim, out_dim):
    """Deterministic init mirroring nn.Linear default (uniform +/- 1/sqrt(fan_in)).

    PyTorch stores weight as (out_dim, input_dim); we keep the transposed
    (input_dim, out_dim) layout so the kernel does x @ W directly.
    """
    k_w, k_b = jax.random.split(key)
    bound = 1.0 / (input_dim ** 0.5)
    w = jax.random.uniform(k_w, (input_dim, out_dim), jnp.float32, -bound, bound)
    b = jax.random.uniform(k_b, (out_dim,), jnp.float32, -bound, bound)
    return w, b


if __name__ == "__main__":
    key = jax.random.PRNGKey(0)
    k_x, k_p, k_x2, k_p2, k_x3, k_p3 = jax.random.split(key, 6)

    # 1) Small module-like case, exact f32 operand path.
    batch, d_in, d_out = 8, 32, 32
    x = jax.random.normal(k_x, (batch, d_in), jnp.float32)
    w, b = init_mlp_params(k_p, d_in, d_out)
    out = mlp_forward(x, w, b, operand_dtype=jnp.float32)
    jax.block_until_ready(out)
    ref = jnp.maximum(x @ w + b, 0.0)
    assert out.shape == (batch, d_out)
    assert jnp.allclose(out, ref, atol=1e-5, rtol=1e-5)

    # 2) Ragged / non-multiple case, f32 path (padding + M/N tiling + N split).
    b2, di2, do2 = 130, 96, 160
    x2 = jax.random.normal(k_x2, (b2, di2), jnp.float32)
    w2, bb2 = init_mlp_params(k_p2, di2, do2)
    fwd2 = make_mlp(w2, bb2, operand_dtype=jnp.float32)
    out2 = fwd2(x2)
    jax.block_until_ready(out2)
    ref2 = jnp.maximum(x2 @ w2 + bb2, 0.0)
    assert out2.shape == (b2, do2)
    assert jnp.allclose(out2, ref2, atol=1e-5, rtol=1e-5)

    # 3) Default fast path: bf16 MXU operands (HBM-level cast), f32 accumulation.
    b3, di3, do3 = 64, 256, 512
    x3 = jax.random.normal(k_x3, (b3, di3), jnp.float32)
    w3, bb3 = init_mlp_params(k_p3, di3, do3)
    fwd3 = make_mlp(w3, bb3)  # operand_dtype=jnp.bfloat16 default
    out3 = fwd3(x3)
    jax.block_until_ready(out3)
    ref3_bf16 = jnp.maximum(
        jnp.dot(x3.astype(jnp.bfloat16), w3.astype(jnp.bfloat16),
                preferred_element_type=jnp.float32) + bb3, 0.0)
    ref3_f32 = jnp.maximum(x3 @ w3 + bb3, 0.0)
    assert out3.shape == (b3, do3)
    assert jnp.allclose(out3, ref3_bf16, atol=2e-3, rtol=2e-3)
    assert jnp.allclose(out3, ref3_f32, atol=1e-1, rtol=1e-1)

    print("KERNEL_OK")
</pallas_src>

<mosaic_0001>
module attributes {stable_mosaic.version = 11 : i64} {
  func.func @_mlp_kernel(%arg0: i32, %arg1: i32, %arg2: i32, %arg3: memref<8x128xf32, #tpu.memory_space<vmem>>, %arg4: memref<128x128xf32, #tpu.memory_space<vmem>>, %arg5: memref<1x128xf32, #tpu.memory_space<vmem>>, %arg6: memref<8x128xf32, #tpu.memory_space<vmem>>) attributes {dimension_semantics = [#tpu.dimension_semantics<parallel>, #tpu.dimension_semantics<parallel>, #tpu.dimension_semantics<arbitrary>], iteration_bounds = array<i64: 1, 1, 1>, scalar_prefetch = 0 : i64, scratch_operands = 0 : i64, tpu.core_type = #tpu.core_type<tc>, window_params = [{transform_indices = @transform_0, window_bounds = array<i64: 8, 128>}, {transform_indices = @transform_1, window_bounds = array<i64: 128, 128>}, {transform_indices = @transform_2, window_bounds = array<i64: 1, 128>}, {transform_indices = @transform_3, window_bounds = array<i64: 8, 128>}]} {
    %c0_i32 = arith.constant 0 : i32
    %0 = arith.cmpi eq, %arg2, %c0_i32 : i32
    %1 = arith.extui %0 : i1 to i32
    %c0_i32_0 = arith.constant 0 : i32
    %2 = arith.cmpi ne, %1, %c0_i32_0 : i32
    scf.if %2 {
      %cst_10 = arith.constant 0.000000e+00 : f32
      %12 = vector.broadcast %cst_10 : f32 to vector<8x128xf32>
      %c0_11 = arith.constant 0 : index
      %c0_12 = arith.constant 0 : index
      %13 = vector.load %arg6[%c0_11, %c0_12] : memref<8x128xf32, #tpu.memory_space<vmem>>, vector<8x128xf32>
      tpu.vector_store %arg6[%c0_11, %c0_12], %12 {strides = array<i32>} : memref<8x128xf32, #tpu.memory_space<vmem>>, vector<8x128xf32>,
    } else {
    }
    %c0 = arith.constant 0 : index
    %c0_1 = arith.constant 0 : index
    %3 = vector.load %arg6[%c0, %c0_1] : memref<8x128xf32, #tpu.memory_space<vmem>>, vector<8x128xf32>
    %c0_2 = arith.constant 0 : index
    %c0_3 = arith.constant 0 : index
    %4 = vector.load %arg3[%c0_2, %c0_3] : memref<8x128xf32, #tpu.memory_space<vmem>>, vector<8x128xf32>
    %c0_4 = arith.constant 0 : index
    %c0_5 = arith.constant 0 : index
    %5 = vector.load %arg4[%c0_4, %c0_5] : memref<128x128xf32, #tpu.memory_space<vmem>>, vector<128x128xf32>
    %cst = arith.constant dense<0.000000e+00> : vector<8x128xf32>
    %6 = tpu.matmul %4, %5, %cst {dimension_numbers = #tpu.dot_dimension_numbers<[1], [0], [0], [1], [0, 0, 1, 1], [], []>} : vector<8x128xf32>, vector<128x128xf32>, vector<8x128xf32> -> vector<8x128xf32>
    %7 = arith.addf %3, %6 : vector<8x128xf32>
    %c0_6 = arith.constant 0 : index
    %c0_7 = arith.constant 0 : index
    %8 = vector.load %arg6[%c0_6, %c0_7] : memref<8x128xf32, #tpu.memory_space<vmem>>, vector<8x128xf32>
    tpu.vector_store %arg6[%c0_6, %c0_7], %7 {strides = array<i32>} : memref<8x128xf32, #tpu.memory_space<vmem>>, vector<8x128xf32>,
    %c0_i32_8 = arith.constant 0 : i32
    %9 = arith.cmpi eq, %arg2, %c0_i32_8 : i32
    %10 = arith.extui %9 : i1 to i32
    %c0_i32_9 = arith.constant 0 : i32
    %11 = arith.cmpi ne, %10, %c0_i32_9 : i32
    scf.if %11 {
      %c0_10 = arith.constant 0 : index
      %c0_11 = arith.constant 0 : index
      %12 = vector.load %arg6[%c0_10, %c0_11] : memref<8x128xf32, #tpu.memory_space<vmem>>, vector<8x128xf32>
      %c0_12 = arith.constant 0 : index
      %c0_13 = arith.constant 0 : index
      %13 = vector.load %arg5[%c0_12, %c0_13] : memref<1x128xf32, #tpu.memory_space<vmem>>, vector<1x128xf32>
      %14 = vector.broadcast %13 : vector<1x128xf32> to vector<8x128xf32>
      %15 = arith.addf %12, %14 : vector<8x128xf32>
      %cst_14 = arith.constant 0.000000e+00 : f32
      %16 = vector.broadcast %cst_14 : f32 to vector<8x128xf32>
      %17 = arith.maximumf %15, %16 : vector<8x128xf32>
      %c0_15 = arith.constant 0 : index
      %c0_16 = arith.constant 0 : index
      %18 = vector.load %arg6[%c0_15, %c0_16] : memref<8x128xf32, #tpu.memory_space<vmem>>, vector<8x128xf32>
      tpu.vector_store %arg6[%c0_15, %c0_16], %17 {strides = array<i32>} : memref<8x128xf32, #tpu.memory_space<vmem>>, vector<8x128xf32>,
    } else {
    }
    return
  }
  func.func @transform_0(%arg0: i32, %arg1: i32, %arg2: i32) -> (i32, i32) {
    %c0_i32 = arith.constant 0 : i32
    return %arg0, %arg2 : i32, i32
  }
  func.func @transform_1(%arg0: i32, %arg1: i32, %arg2: i32) -> (i32, i32) {
    %c0_i32 = arith.constant 0 : i32
    return %arg2, %arg1 : i32, i32
  }
  func.func @transform_2(%arg0: i32, %arg1: i32, %arg2: i32) -> (i32, i32) {
    %c0_i32 = arith.constant 0 : i32
    %c0_i32_0 = arith.constant 0 : i32
    return %c0_i32, %arg1 : i32, i32
  }
  func.func @transform_3(%arg0: i32, %arg1: i32, %arg2: i32) -> (i32, i32) {
    %c0_i32 = arith.constant 0 : i32
    return %arg0, %arg1 : i32, i32
  }
}

</mosaic_0001>

<llo_original>
// kernel: tpu_custom_call.1
$region0: #{tpu_custom_call.1}
  #allocation0 [shape = 'u32[]', space=smem, size = 0x4, offset = 0x4, fixed_abs, tag = 'smem constant byte address 0x4 - core index']
  #allocation1 [shape = 'u32[72,128]{1,0:T(1,128)}', space=vmem, size = 0x9000, scoped, tag = 'internal scratch']
  %s0 = inlined_call_operand.hbm [shape: f32[8,128], index: 0, kind: input, shape index: {}]
  %s1 = inlined_call_operand.hbm [shape: f32[128,128], index: 1, kind: input, shape index: {}]
  %s2 = inlined_call_operand.vmem [shape: f32[1,128], index: 2, kind: input, shape index: {}]
  %s3 = inlined_call_operand.hbm [shape: f32[8,128], index: 3, kind: output, shape index: {}]
  %s4 = sld [smem:[#allocation0]]
  $region38: #{tpu_custom_call.1} parent=0
    _
  %s6 = ssub.s32 1, %s4
  %s7 = scalar_select 0, %s6, %s4
  $region1: #{tpu_custom_call.1} parent=0
    #allocation2 [shape = 'u8[4096]{0}', space=vmem, size = 0x1000, scoped, tag = 'input window, operand 0, single buffered']
    #allocation3 [shape = 's32[1]{0}', space=sflag, size = 0x4, scoped, tag = 'scoped memory for tpu_custom_call.1']
    #allocation4 [shape = 's32[1]{0}', space=sflag, size = 0x4, scoped, tag = 'scoped memory for tpu_custom_call.1']
    #allocation5 [shape = 'u8[65536]{0}', space=vmem, size = 0x10000, scoped, tag = 'input window, operand 1, single buffered']
    #allocation6 [shape = 's32[1]{0}', space=sflag, size = 0x4, scoped, tag = 'scoped memory for tpu_custom_call.1']
    #allocation7 [shape = 'u8[4096]{0}', space=vmem, size = 0x1000, scoped, tag = 'output window, operand 0, single buffered']
    %8 = vsyncpa [#allocation3], 0
    %9 = vsyncpa [#allocation6], 0
    %10 = vsyncpa [#allocation4], 0
    // Predicated region
    $region2: #{tpu_custom_call.1} parent=1 // pred_check
      _
    $region3: #{tpu_custom_call.1} parent=1 // pred_check_branch
      %12 = sbr.rel (0) target = $region5
    $region4: #{tpu_custom_call.1} parent=1 // pred_region
      %14 = vsyncadd [#allocation3], 0
      %s16 = sshll.u32 %s0, 4
      %s17 = int_to_ptr.hbm [resolvable:$true] %s16
      %s18 = sshll.u32 [#allocation2], 4
      %s19 = int_to_ptr.vmem [resolvable:$true] %s18
      %21 = dma.hbm_to_vmem [thread:$0]  %s17, 128, %s19, [#allocation3]
    $region5: #{tpu_custom_call.1} parent=1 // pred_fallthru
      _
    // Predicated region
    $region6: #{tpu_custom_call.1} parent=1 // pred_check
      _
    $region7: #{tpu_custom_call.1} parent=1 // pred_check_branch
      %23 = sbr.rel (0) target = $region9
    $region8: #{tpu_custom_call.1} parent=1 // pred_region
      %25 = vsyncadd [#allocation6], 0
      %s26 = sshll.u32 %s1, 4
      %s27 = int_to_ptr.hbm [resolvable:$true] %s26
      %s28 = sshll.u32 [#allocation5], 4
      %s29 = int_to_ptr.vmem [resolvable:$true] %s28
      %34 = dma.hbm_to_vmem [thread:$0]  %s27, 2048, %s29, [#allocation6], 128, 128, 8
    $region9: #{tpu_custom_call.1} parent=1 // pred_fallthru
      _
    // Predicated region
    $region10: #{tpu_custom_call.1} parent=1 // pred_check
      _
    $region11: #{tpu_custom_call.1} parent=1 // pred_check_branch
      %36 = sbr.rel (0) target = $region13
    $region12: #{tpu_custom_call.1} parent=1 // pred_region
      _
    $region13: #{tpu_custom_call.1} parent=1 // pred_fallthru
      _
    // Predicated region
    $region14: #{tpu_custom_call.1} parent=1 // pred_check
      _
    $region15: #{tpu_custom_call.1} parent=1 // pred_check_branch
      %38 = sbr.rel (0) target = $region17
    $region16: #{tpu_custom_call.1} parent=1 // pred_region
      %40 = dma.done [#allocation3], 128
    $region17: #{tpu_custom_call.1} parent=1 // pred_fallthru
      _
    // Predicated region
    $region18: #{tpu_custom_call.1} parent=1 // pred_check
      _
    $region19: #{tpu_custom_call.1} parent=1 // pred_check_branch
      %42 = sbr.rel (0) target = $region21
    $region20: #{tpu_custom_call.1} parent=1 // pred_region
      %44 = dma.done [#allocation6], 2048
    $region21: #{tpu_custom_call.1} parent=1 // pred_fallthru
      _
    %p45 = scmp.eq.s32.totalorder 0, 0
    // Predicated region
    $region22: #{tpu_custom_call.1} parent=1 // pred_check
      %p46 = pneg %p45
    $region23: #{tpu_custom_call.1} parent=1 // pred_check_branch
      %48 = sbr.rel (%p46) target = $region25
    $region24: #{tpu_custom_call.1} parent=1 // pred_region
      %49 = vst [vmem:[#allocation7] sm:$0xff] 0.0
    $region25: #{tpu_custom_call.1} parent=1 // pred_fallthru
      _
    %v50 = vld [vmem:[#allocation7] sm:$0xff]
    %v51 = vld [vmem:[#allocation2] sm:$0xff]
    %v52 = vld [vmem:[#allocation5] sm:$0xff]
    %v53 = vld [vmem:[#allocation5 + $0x8] sm:$0xff]
    %v54 = vld [vmem:[#allocation5 + $0x10] sm:$0xff]
    %v55 = vld [vmem:[#allocation5 + $0x18] sm:$0xff]
    %v56 = vld [vmem:[#allocation5 + $0x20] sm:$0xff]
    %v57 = vld [vmem:[#allocation5 + $0x28] sm:$0xff]
    %v58 = vld [vmem:[#allocation5 + $0x30] sm:$0xff]
    %v59 = vld [vmem:[#allocation5 + $0x38] sm:$0xff]
    %v60 = vld [vmem:[#allocation5 + $0x40] sm:$0xff]
    %v61 = vld [vmem:[#allocation5 + $0x48] sm:$0xff]
    %v62 = vld [vmem:[#allocation5 + $0x50] sm:$0xff]
    %v63 = vld [vmem:[#allocation5 + $0x58] sm:$0xff]
    %v64 = vld [vmem:[#allocation5 + $0x60] sm:$0xff]
    %v65 = vld [vmem:[#allocation5 + $0x68] sm:$0xff]
    %v66 = vld [vmem:[#allocation5 + $0x70] sm:$0xff]
    %v67 = vld [vmem:[#allocation5 + $0x78] sm:$0xff]
    %68 = vmatpush.msra.mxu0 %v67
    %69 = vmatpush.msra.mxu0 %v66
    %70 = vmatpush.msra.mxu0 %v65
    %71 = vmatpush.msra.mxu0 %v64
    %72 = vmatpush.msra.mxu0 %v63
    %73 = vmatpush.msra.mxu0 %v62
    %74 = vmatpush.msra.mxu0 %v61
    %75 = vmatpush.msra.mxu0 %v60
    %76 = vmatpush.msra.mxu0 %v59
    %77 = vmatpush.msra.mxu0 %v58
    %78 = vmatpush.msra.mxu0 %v57
    %79 = vmatpush.msra.mxu0 %v56
    %80 = vmatpush.msra.mxu0 %v55
    %81 = vmatpush.msra.mxu0 %v54
    %82 = vmatpush.msra.mxu0 %v53
    %83 = vmatpush.msra.mxu0 %v52
    %84 = vmatmul.f32.gmra.mxu0 %v51
    %v85 = vpop.f32.mrf.mxu0
    %v86 = vadd.f32 0.0, %v85
    %87 = vdwg.mxu0
    %v88 = vadd.f32 %v50, %v86
    %89 = vst [vmem:[#allocation7] sm:$0xff] %v88
    // Predicated region
    $region26: #{tpu_custom_call.1} parent=1 // pred_check
      %p90 = pneg %p45
    $region27: #{tpu_custom_call.1} parent=1 // pred_check_branch
      %92 = sbr.rel (%p90) target = $region29
    $region28: #{tpu_custom_call.1} parent=1 // pred_region
      %v93 = vld [vmem:[#allocation7] sm:$0xff]
      %v94 = vld [vmem:[%s2] sm:$0x1]
      %v96 = vperm.slane %v94, 0
      %v98 = vadd.f32 %v93, %v96
      %v99 = vmax.f32 %v98, 0.0
      %100 = vst [vmem:[#allocation7] sm:$0xff] %v99
    $region29: #{tpu_custom_call.1} parent=1 // pred_fallthru
      _
    // Predicated region
    $region30: #{tpu_custom_call.1} parent=1 // pred_check
      _
    $region31: #{tpu_custom_call.1} parent=1 // pred_check_branch
      %102 = sbr.rel (0) target = $region33
    $region32: #{tpu_custom_call.1} parent=1 // pred_region
      %104 = vsyncadd [#allocation4], 0
      %s106 = sshll.u32 [#allocation7], 4
      %s107 = int_to_ptr.vmem [resolvable:$true] %s106
      %s108 = sshll.u32 %s3, 4
      %s109 = int_to_ptr.hbm [resolvable:$true] %s108
      %111 = dma.vmem_to_hbm [thread:$0]  %s107, 128, %s109, [#allocation4]
    $region33: #{tpu_custom_call.1} parent=1 // pred_fallthru
      _
    // Predicated region
    $region34: #{tpu_custom_call.1} parent=1 // pred_check
      _
    $region35: #{tpu_custom_call.1} parent=1 // pred_check_branch
      %113 = sbr.rel (0) target = $region37
    $region36: #{tpu_custom_call.1} parent=1 // pred_region
      %115 = dma.done [#allocation4], 128
    $region37: #{tpu_custom_call.1} parent=1 // pred_fallthru
      _
    %116 = vsyncpa [#allocation3], 1
    %117 = vsyncpa [#allocation6], 1
    %118 = vsyncpa [#allocation4], 1

</llo_original>
